<compile_context>
chip_gen: v7x
topology: tpu7x:2x2x1
jax: 0.10.0
libtpu: 0.0.40
codegen_flags: <defaults>
</compile_context>

<pallas_src>
import functools

import numpy as np

import jax
import jax.numpy as jnp
from jax.experimental import pallas as pl
from jax.experimental.pallas import tpu as pltpu

NEG_SLOPE = 0.3
EPS = 1e-5


def _leaky(x):
    return jnp.where(x > 0, x, NEG_SLOPE * x)


# -----------------------------------------------------------------------------
# One-time calibration: does pltpu.roll follow np.roll's shift direction?
# Result is a static Python bool; asserted (not silently flipped on garbage).
# -----------------------------------------------------------------------------
@functools.lru_cache(maxsize=1)
def _roll_like_np():
    def k(x_ref, o_ref):
        o_ref[...] = pltpu.roll(x_ref[...], 1, 1)

    x = jnp.tile(jnp.arange(128, dtype=jnp.float32)[None, :], (8, 1))
    y = pl.pallas_call(k, out_shape=jax.ShapeDtypeStruct((8, 128), jnp.float32))(x)
    v = float(y[0, 0])
    assert v in (127.0, 1.0), f"unexpected pltpu.roll semantics: {v}"
    return v == 127.0


# -----------------------------------------------------------------------------
# Host-side preparation: fold BN, pack per-stage stacked weights, build masks.
# -----------------------------------------------------------------------------
def _taps_dict(w_hwio, gamma, beta, mean, var, cpad):
    """HWIO conv + eval-BN -> {(oh,ow): (cpad,cpad) weight}, (cpad,) bias."""
    w = np.asarray(w_hwio).astype(np.float32)
    gamma, beta, mean, var = (np.asarray(a).astype(np.float32)
                              for a in (gamma, beta, mean, var))
    kh, kw, cin, cout = w.shape
    scale = gamma / np.sqrt(var + EPS)
    bias = beta - mean * scale
    w = w * scale                                   # fold BN scale (over cout)
    ph, pw = (kh - 1) // 2, (kw - 1) // 2
    taps = {}
    for dh in range(kh):
        for dw in range(kw):
            m = np.zeros((cpad, cpad), np.float32)
            m[:cout, :cin] = w[dh, dw].T            # (cout, cin)
            taps[(dh - ph, dw - pw)] = m
    b = np.zeros((cpad,), np.float32)
    b[:cout] = bias
    return taps, b


def prepare_params(params):
    """Fold eval-mode BatchNorm and pack stage-merged weights for the kernel."""
    w3 = np.asarray(params["p1_conv3x3"][0])
    Co, C = w3.shape[2], w3.shape[3]                # cin = Co, cout = C
    cpad = -(-max(C, Co) // 8) * 8                  # pad channels to f32 sublane tile

    t33, b33 = _taps_dict(*params["p1_conv3x3"], cpad)
    t19, b19 = _taps_dict(*params["p1_conv1x9"], cpad)
    t91, b91 = _taps_dict(*params["p1_conv9x1"], cpad)
    t15, b15 = _taps_dict(*params["p2_conv1x5"], cpad)
    t51, b51 = _taps_dict(*params["p2_conv5x1"], cpad)

    # Stage A: conv3x3(x) & conv1x5(x) merged over the union of their taps.
    offsA = sorted(set(t33) | set(t15))             # 11 offsets
    nA = len(offsA)
    wA = np.zeros((2 * cpad, nA * cpad), np.float32)
    for t, off in enumerate(offsA):
        if off in t33:
            wA[:cpad, t * cpad:(t + 1) * cpad] = t33[off]
        if off in t15:
            wA[cpad:, t * cpad:(t + 1) * cpad] = t15[off]
    bA = np.concatenate([b33, b15]).reshape(2 * cpad, 1)

    # Stage B: conv1x9 on h (horizontal taps -4..4).
    wB = np.zeros((cpad, 9 * cpad), np.float32)
    for t, ow in enumerate(range(-4, 5)):
        wB[:, t * cpad:(t + 1) * cpad] = t19[(0, ow)]
    bB = b19.reshape(cpad, 1)

    # Stage C: conv9x1(h2) & conv5x1(g) merged block-diagonally (vertical taps).
    wC = np.zeros((2 * cpad, 9 * 2 * cpad), np.float32)
    for t, oh in enumerate(range(-4, 5)):
        wC[:cpad, t * 2 * cpad: t * 2 * cpad + cpad] = t91[(oh, 0)]
        if (oh, 0) in t51:
            wC[cpad:, t * 2 * cpad + cpad: (t + 1) * 2 * cpad] = t51[(oh, 0)]
    bC = np.concatenate([b91, b51]).reshape(2 * cpad, 1)

    # Stage D: 1x1 fuse conv + BN.
    gamma, beta, mean, var = (np.asarray(a).astype(np.float32)
                              for a in params["conv1x1_bn"])
    scale = gamma / np.sqrt(var + EPS)
    bias = beta - mean * scale
    w = (np.asarray(params["conv1x1_w"]).reshape(2 * C, Co) * scale).T  # (Co, 2C)
    wD = np.zeros((cpad, 2 * cpad), np.float32)
    wD[:Co, :C] = w[:, :C]                          # out1 channels
    wD[:Co, cpad:cpad + C] = w[:, C:]               # out2 channels
    bD = np.zeros((cpad, 1), np.float32)
    bD[:Co, 0] = bias

    packed = tuple(jnp.asarray(a) for a in (wA, bA, wB, bB, wC, bC, wD, bD))
    return {"C": C, "Co": Co, "cpad": cpad, "offsA": tuple(offsA), "packed": packed}


def _build_masks(H, W, B, offsA):
    """Per-tap boundary masks, tiled over batch: rows = offsA ++ horiz ++ vert."""
    p = np.arange(H * W)
    hh, ww = p // W, p % W

    def m(oh, ow):
        return (((hh + oh) >= 0) & ((hh + oh) < H) &
                ((ww + ow) >= 0) & ((ww + ow) < W)).astype(np.float32)

    rows = [m(oh, ow) for (oh, ow) in offsA]
    rows += [m(0, ow) for ow in range(-4, 5)]
    rows += [m(oh, 0) for oh in range(-4, 5)]
    mk = np.stack(rows, axis=0)                     # (nA + 18, HW)
    return np.tile(mk, (1, B))                      # (nA + 18, B*HW)


# -----------------------------------------------------------------------------
# The fused Pallas kernel
# -----------------------------------------------------------------------------
def _build_kernel(W, N, cpad, offsA, roll_np):
    nA = len(offsA)
    rowB0, rowC0 = nA, nA + 9

    def kernel(x_ref, mask_ref, wA_ref, bA_ref, wB_ref, bB_ref,
               wC_ref, bC_ref, wD_ref, bD_ref, out_ref, tap_ref):

        def put_tap(row0, rows, src, delta, mrow, need_mask):
            shift = ((-delta) if roll_np else delta) % N
            r = pltpu.roll(src, shift, 1) if shift else src
            if need_mask:
                r = r * mask_ref[mrow:mrow + 1, :]
            tap_ref[row0:row0 + rows, :] = r

        x = x_ref[...]                                          # (cpad, N)

        # Stage A: conv3x3(x) & conv1x5(x) as one stacked dot over 11 taps.
        for t, (oh, ow) in enumerate(offsA):
            put_tap(t * cpad, cpad, x, oh * W + ow, t, (oh, ow) != (0, 0))
        hg = _leaky(jnp.dot(wA_ref[...], tap_ref[0:nA * cpad, :],
                            preferred_element_type=jnp.float32) + bA_ref[...])
        h = hg[0:cpad, :]                                       # conv3x3 branch
        g = hg[cpad:, :]                                        # conv1x5 branch

        # Stage B: conv1x9 on h.
        for t, ow in enumerate(range(-4, 5)):
            put_tap(t * cpad, cpad, h, ow, rowB0 + t, ow != 0)
        h2 = _leaky(jnp.dot(wB_ref[...], tap_ref[0:9 * cpad, :],
                            preferred_element_type=jnp.float32) + bB_ref[...])

        # Stage C: conv9x1(h2) & conv5x1(g) as one block-diagonal dot whose
        # output is already the concatenated [out1; out2].
        z = jnp.concatenate([h2, g], axis=0)                    # (2*cpad, N)
        for t, oh in enumerate(range(-4, 5)):
            put_tap(t * 2 * cpad, 2 * cpad, z, oh * W, rowC0 + t, oh != 0)
        a = _leaky(jnp.dot(wC_ref[...], tap_ref[0:18 * cpad, :],
                           preferred_element_type=jnp.float32) + bC_ref[...])

        # Stage D: 1x1 conv (+BN) + residual + LeakyReLU; full-cpad unmasked store.
        y = jnp.dot(wD_ref[...], a, preferred_element_type=jnp.float32) + bD_ref[...]
        out_ref[...] = _leaky(y + x).astype(out_ref.dtype)

    return kernel


def crblock_forward(x_nchw, prep):
    B, Co, H, W = x_nchw.shape
    HW = H * W
    N = B * HW
    cpad = prep["cpad"]
    assert Co == prep["Co"]

    # NCHW -> channels-first with batch folded into the lane axis: (cpad, B*HW).
    xp = jnp.transpose(x_nchw.reshape(B, Co, HW), (1, 0, 2)).reshape(Co, N)
    if cpad > Co:
        xp = jnp.pad(xp, ((0, cpad - Co), (0, 0)))
    masks = jnp.asarray(_build_masks(H, W, B, prep["offsA"]))

    kernel = _build_kernel(W, N, cpad, prep["offsA"], _roll_like_np())

    nA = len(prep["offsA"])
    flops = 2 * N * (2 * cpad * nA * cpad + cpad * 9 * cpad
                     + 2 * cpad * 18 * cpad + cpad * 2 * cpad)
    weight_elems = sum(int(np.prod(a.shape)) for a in prep["packed"])
    bytes_accessed = 4 * (2 * cpad * N + int(masks.size) + weight_elems)

    out = pl.pallas_call(
        kernel,
        out_shape=jax.ShapeDtypeStruct((cpad, N), jnp.float32),
        scratch_shapes=[pltpu.VMEM((18 * cpad, N), jnp.float32)],
        cost_estimate=pl.CostEstimate(flops=flops, transcendentals=0,
                                      bytes_accessed=bytes_accessed),
    )(xp, masks, *prep["packed"])

    # (cpad, B*HW) -> (B, Co, H, W)
    out = out[:Co].reshape(Co, B, HW).transpose(1, 0, 2).reshape(B, Co, H, W)
    return out


# -----------------------------------------------------------------------------
# Pure-JAX reference (eval-mode BN), same as the validated baseline
# -----------------------------------------------------------------------------
def _ref_convbn(x, convbn, kh, kw):
    w, gamma, beta, mean, var = convbn
    ph, pw = (kh - 1) // 2, (kw - 1) // 2
    y = jax.lax.conv_general_dilated(
        x, w, window_strides=(1, 1), padding=[(ph, ph), (pw, pw)],
        dimension_numbers=("NHWC", "HWIO", "NHWC"))
    return (y - mean) / jnp.sqrt(var + EPS) * gamma + beta


def crblock_reference(x_nchw, params):
    x = jnp.transpose(x_nchw, (0, 2, 3, 1))
    h = _leaky(_ref_convbn(x, params["p1_conv3x3"], 3, 3))
    h = _leaky(_ref_convbn(h, params["p1_conv1x9"], 1, 9))
    out1 = _ref_convbn(h, params["p1_conv9x1"], 9, 1)
    g = _leaky(_ref_convbn(x, params["p2_conv1x5"], 1, 5))
    out2 = _ref_convbn(g, params["p2_conv5x1"], 5, 1)
    out = _leaky(jnp.concatenate([out1, out2], axis=-1))
    gamma, beta, mean, var = params["conv1x1_bn"]
    out = _ref_convbn(out, (params["conv1x1_w"], gamma, beta, mean, var), 1, 1)
    out = _leaky(out + x)
    return jnp.transpose(out, (0, 3, 1, 2))


# -----------------------------------------------------------------------------
# Deterministic parameter init
# -----------------------------------------------------------------------------
def _make_convbn(key, kh, kw, cin, cout):
    kw_, kg, kb, km, kv = jax.random.split(key, 5)
    w = jax.random.normal(kw_, (kh, kw, cin, cout), jnp.float32) * 0.1
    gamma = jax.random.uniform(kg, (cout,), jnp.float32, 0.5, 1.5)
    beta = jax.random.normal(kb, (cout,), jnp.float32) * 0.1
    mean = jax.random.normal(km, (cout,), jnp.float32) * 0.1
    var = jax.random.uniform(kv, (cout,), jnp.float32, 0.5, 1.5)
    return (w, gamma, beta, mean, var)


def make_params(key, channel_size, original_channel_size):
    C, Co = channel_size, original_channel_size
    keys = jax.random.split(key, 6)
    params = {
        "p1_conv3x3": _make_convbn(keys[0], 3, 3, Co, C),
        "p1_conv1x9": _make_convbn(keys[1], 1, 9, C, C),
        "p1_conv9x1": _make_convbn(keys[2], 9, 1, C, C),
        "p2_conv1x5": _make_convbn(keys[3], 1, 5, Co, C),
        "p2_conv5x1": _make_convbn(keys[4], 5, 1, C, C),
    }
    w, gamma, beta, mean, var = _make_convbn(keys[5], 1, 1, 2 * C, Co)
    params["conv1x1_w"] = w
    params["conv1x1_bn"] = (gamma, beta, mean, var)
    return params


# -----------------------------------------------------------------------------
if __name__ == "__main__":
    B, Co, C, H, W = 2, 4, 8, 16, 16      # original_channel_size=4, channel_size=8
    key = jax.random.PRNGKey(0)
    kx, kp = jax.random.split(key)
    x = jax.random.normal(kx, (B, Co, H, W), jnp.float32)   # NCHW, like PyTorch
    params = make_params(kp, C, Co)
    prep = prepare_params(params)

    out = jax.block_until_ready(crblock_forward(x, prep))
    ref = jax.block_until_ready(crblock_reference(x, params))

    assert out.shape == (B, Co, H, W), out.shape
    err = float(jnp.max(jnp.abs(out - ref)))
    assert jnp.allclose(out, ref, rtol=1e-3, atol=1e-3), err
    print("KERNEL_OK")
</pallas_src>

<mosaic_0001>
module attributes {stable_mosaic.version = 11 : i64} {
  func.func @k(%arg0: memref<8x128xf32, #tpu.memory_space<vmem>>, %arg1: memref<8x128xf32, #tpu.memory_space<vmem>>) attributes {dimension_semantics = [], scalar_prefetch = 0 : i64, scratch_operands = 0 : i64, tpu.core_type = #tpu.core_type<tc>} {
    %c0 = arith.constant 0 : index
    %c0_0 = arith.constant 0 : index
    %0 = vector.load %arg0[%c0, %c0_0] : memref<8x128xf32, #tpu.memory_space<vmem>>, vector<8x128xf32>
    %c1_i32 = arith.constant 1 : i32
    %1 = tpu.dynamic_rotate %0 by %c1_i32 dim 1 : vector<8x128xf32>, i32 -> vector<8x128xf32>
    %c0_1 = arith.constant 0 : index
    %c0_2 = arith.constant 0 : index
    %2 = vector.load %arg1[%c0_1, %c0_2] : memref<8x128xf32, #tpu.memory_space<vmem>>, vector<8x128xf32>
    tpu.vector_store %arg1[%c0_1, %c0_2], %1 {strides = array<i32>} : memref<8x128xf32, #tpu.memory_space<vmem>>, vector<8x128xf32>,
    return
  }
}

</mosaic_0001>

<llo_original>
// kernel: tpu_custom_call.1
$region0: #{tpu_custom_call.1}
  #allocation0 [shape = 'u32[]', space=smem, size = 0x4, offset = 0x4, fixed_abs, tag = 'smem constant byte address 0x4 - core index']
  #allocation1 [shape = 'u32[144,128]{1,0:T(1,128)}', space=vmem, size = 0x12000, scoped, tag = 'internal scratch']
  %s0 = inlined_call_operand.hbm [shape: f32[8,128], index: 0, kind: input, shape index: {}]
  %s1 = inlined_call_operand.hbm [shape: f32[8,128], index: 1, kind: output, shape index: {}]
  %s2 = sld [smem:[#allocation0]]
  $region18: #{tpu_custom_call.1} parent=0
    _
  %s4 = ssub.s32 1, %s2
  %s5 = scalar_select 0, %s4, %s2
  $region1: #{tpu_custom_call.1} parent=0
    #allocation2 [shape = 'u8[4096]{0}', space=vmem, size = 0x1000, scoped, tag = 'input window, operand 0, single buffered']
    #allocation3 [shape = 's32[1]{0}', space=sflag, size = 0x4, scoped, tag = 'scoped memory for tpu_custom_call.1']
    #allocation4 [shape = 's32[1]{0}', space=sflag, size = 0x4, scoped, tag = 'scoped memory for tpu_custom_call.1']
    #allocation5 [shape = 'u8[4096]{0}', space=vmem, size = 0x1000, scoped, tag = 'output window, operand 0, single buffered']
    %6 = vsyncpa [#allocation3], 0
    %7 = vsyncpa [#allocation4], 0
    // Predicated region
    $region2: #{tpu_custom_call.1} parent=1 // pred_check
      _
    $region3: #{tpu_custom_call.1} parent=1 // pred_check_branch
      %9 = sbr.rel (0) target = $region5
    $region4: #{tpu_custom_call.1} parent=1 // pred_region
      %s11 = ssub.s32 128, 128
      %12 = vsyncadd [#allocation3], %s11
      %s14 = sshll.u32 [#allocation2], 4
      %s15 = int_to_ptr.vmem [resolvable:$true] %s14
      %17 = dma.hbm_to_vmem [thread:$0]  %s0, 128, %s15, [#allocation3]
    $region5: #{tpu_custom_call.1} parent=1 // pred_fallthru
      _
    // Predicated region
    $region6: #{tpu_custom_call.1} parent=1 // pred_check
      _
    $region7: #{tpu_custom_call.1} parent=1 // pred_check_branch
      %19 = sbr.rel (0) target = $region9
    $region8: #{tpu_custom_call.1} parent=1 // pred_region
      %20 = dma.done [#allocation3], 128
    $region9: #{tpu_custom_call.1} parent=1 // pred_fallthru
      _
    %v21 = vld [vmem:[#allocation2] sm:$0xff]
    %22 = vrot.lane.b32.xlu0 %v21, 1
    %v23 = vpop.permute.xlu0 %22
    %24 = vst [vmem:[#allocation5] sm:$0xff] %v23
    // Predicated region
    $region10: #{tpu_custom_call.1} parent=1 // pred_check
      _
    $region11: #{tpu_custom_call.1} parent=1 // pred_check_branch
      %26 = sbr.rel (0) target = $region13
    $region12: #{tpu_custom_call.1} parent=1 // pred_region
      %s28 = ssub.s32 128, 128
      %29 = vsyncadd [#allocation4], %s28
      %s31 = sshll.u32 [#allocation5], 4
      %s32 = int_to_ptr.vmem [resolvable:$true] %s31
      %34 = dma.vmem_to_hbm [thread:$0]  %s32, 128, %s1, [#allocation4]
    $region13: #{tpu_custom_call.1} parent=1 // pred_fallthru
      _
    // Predicated region
    $region14: #{tpu_custom_call.1} parent=1 // pred_check
      _
    $region15: #{tpu_custom_call.1} parent=1 // pred_check_branch
      %36 = sbr.rel (0) target = $region17
    $region16: #{tpu_custom_call.1} parent=1 // pred_region
      %37 = dma.done [#allocation4], 128
    $region17: #{tpu_custom_call.1} parent=1 // pred_fallthru
      _
    %38 = vsyncpa [#allocation3], 1
    %39 = vsyncpa [#allocation4], 1

</llo_original>
